<compile_context>
chip_gen: v5e
topology: v5e:2x2
jax: 0.10.0
libtpu: 0.0.40
codegen_flags: <defaults>
</compile_context>

<pallas_src>
import jax
import jax.numpy as jnp
from jax.experimental import pallas as pl
from jax.experimental.pallas import tpu as pltpu


_NO_GRID_MAX_B = 4096   # below this, a single no-grid call is fastest everywhere
_MAX_TILE_B = 4096      # per-tile rows; x tile + activations << 32 MiB scoped VMEM


def _round_up(x, m):
    return (x + m - 1) // m * m


def _pick_tile_b(batch):
    """Even number of tiles (>=2) so the 'parallel' batch axis can shard across
    v7x's two TensorCores; tiles capped at _MAX_TILE_B rows and 128-aligned."""
    n = max(2, _round_up(pl.cdiv(batch, _MAX_TILE_B), 2))
    return min(_MAX_TILE_B, _round_up(pl.cdiv(batch, n), 128))


def _make_kernel(apply_sigmoid):
    def kernel(x_ref, w1_ref, b1_ref, w2_ref, b2_ref, o_ref):
        x = x_ref[...]            # (Bt, D)   f32 or bf16
        w1 = w1_ref[...]          # (H, D)    PyTorch [out, in] layout
        b1 = b1_ref[...]          # (H, 1)
        w2 = w2_ref[...]          # (H, 1)    layer-2 weight as a column
        b2 = b2_ref[0, 0]         # scalar from SMEM

        # Layer 1 on the MXU, batch on the LANE axis:
        #   (H, D) contract (Bt, D) on D  ->  (H, Bt)   (f32 accumulation)
        h = jax.lax.dot_general(
            w1, x, (((1,), (1,)), ((), ())),
            preferred_element_type=jnp.float32)
        h = jnp.maximum(h + b1, 0.0)                     # bias + ReLU (VPU, f32)

        # Layer 2 (out_features == 1): VPU multiply + sublane (XLU) reduction,
        # result is already lane-major -> (1, Bt).
        y = jnp.sum(h * w2, axis=0, keepdims=True) + b2  # (1, Bt)

        if apply_sigmoid:
            y = jax.nn.sigmoid(y)                        # forward(): probability
        else:
            # predict() fusion: sigmoid(y) > 0.5  <=>  y > 0.
            y = jnp.where(y > 0.0, 1.0, 0.0)

        o_ref[...] = y.astype(o_ref.dtype)               # lane-dense (1, Bt) store
    return kernel


def _forward_impl(x, w1, b1, w2, b2, *, apply_sigmoid, tile_b):
    batch, in_dim = x.shape
    hidden = w1.shape[0]
    kernel = _make_kernel(apply_sigmoid)

    if tile_b is None and batch <= _NO_GRID_MAX_B:
        # Launch-bound / single-TC friendly path: no grid at all, every operand
        # is a single whole-array block.
        return pl.pallas_call(
            kernel,
            out_shape=jax.ShapeDtypeStruct((1, batch), jnp.float32),
            in_specs=[
                pl.BlockSpec(memory_space=pltpu.MemorySpace.VMEM),   # x
                pl.BlockSpec(memory_space=pltpu.MemorySpace.VMEM),   # w1
                pl.BlockSpec(memory_space=pltpu.MemorySpace.VMEM),   # b1
                pl.BlockSpec(memory_space=pltpu.MemorySpace.VMEM),   # w2
                pl.BlockSpec(memory_space=pltpu.MemorySpace.SMEM),   # b2 scalar
            ],
            out_specs=pl.BlockSpec(memory_space=pltpu.MemorySpace.VMEM),
        )(x, w1, b1, w2, b2)

    if tile_b is None:
        tile_b = _pick_tile_b(batch)
    n_tiles = pl.cdiv(batch, tile_b)   # no padding: Pallas masks the edge tile

    return pl.pallas_call(
        kernel,
        out_shape=jax.ShapeDtypeStruct((1, batch), jnp.float32),
        grid_spec=pltpu.PrefetchScalarGridSpec(
            num_scalar_prefetch=0,
            grid=(n_tiles,),
            in_specs=[
                pl.BlockSpec((tile_b, in_dim), lambda i: (i, 0)),    # x tile
                pl.BlockSpec((hidden, in_dim), lambda i: (0, 0)),    # w1 resident
                pl.BlockSpec((hidden, 1), lambda i: (0, 0)),         # b1 resident
                pl.BlockSpec((hidden, 1), lambda i: (0, 0)),         # w2 resident
                pl.BlockSpec(memory_space=pltpu.MemorySpace.SMEM),   # b2 scalar
            ],
            out_specs=pl.BlockSpec((1, tile_b), lambda i: (0, i)),   # lane-dense
        ),
        compiler_params=pltpu.CompilerParams(
            dimension_semantics=("parallel",)),
    )(x, w1, b1, w2, b2)


def model_forward(x, params, *, tile_b=None, compute_dtype=jnp.float32,
                  fuse_threshold=False):
    """Fused forward pass.  Returns (B, 1) probabilities (or 0/1 decisions when
    `fuse_threshold=True`, implementing predict()'s `output > 0.5` in-kernel)."""
    w1, b1, w2, b2 = params
    batch = x.shape[0]
    out = _forward_impl(
        x.astype(compute_dtype), w1.astype(compute_dtype), b1, w2, b2,
        apply_sigmoid=not fuse_threshold, tile_b=tile_b)
    # (1, B) lane-major row -> (B, 1) column (matches nn.Linear(hidden, 1)).
    return out.reshape(batch, 1)


def init_params(key, in_dim, hidden):
    """Deterministic PyTorch-Linear-like init, in kernel-friendly layouts."""
    k1, k2, k3, k4 = jax.random.split(key, 4)
    s1 = 1.0 / float(jnp.sqrt(in_dim))
    s2 = 1.0 / float(jnp.sqrt(hidden))
    w1 = jax.random.uniform(k1, (hidden, in_dim), jnp.float32, -s1, s1)  # [out,in]
    b1 = jax.random.uniform(k2, (hidden, 1), jnp.float32, -s1, s1)
    w2 = jax.random.uniform(k3, (hidden, 1), jnp.float32, -s2, s2)       # [1,H]^T
    b2 = jax.random.uniform(k4, (1, 1), jnp.float32, -s2, s2)
    return w1, b1, w2, b2


def _reference(x, params):
    w1, b1, w2, b2 = params
    h = jnp.maximum(x @ w1.T + b1[:, 0], 0.0)
    return jax.nn.sigmoid(h @ w2 + b2[0, 0])


if __name__ == "__main__":
    in_dim, hidden = 32, 64
    key = jax.random.PRNGKey(0)
    kp, kx1, kx2 = jax.random.split(key, 3)
    params = init_params(kp, in_dim, hidden)

    # --- small, launch-bound batch: no-grid path ---
    b_small = 8
    x_small = jax.random.normal(kx1, (b_small, in_dim), dtype=jnp.float32)
    out_small = jax.block_until_ready(model_forward(x_small, params))
    ref_small = _reference(x_small, params)
    assert out_small.shape == (b_small, 1)
    assert jnp.allclose(out_small, ref_small, atol=1e-5, rtol=1e-5)

    # Fused predict(): threshold done in-kernel on the pre-sigmoid logit.
    dec_small = jax.block_until_ready(
        model_forward(x_small, params, fuse_threshold=True))
    decided = jnp.abs(ref_small - 0.5) > 1e-4
    assert bool(jnp.all(~decided | ((dec_small > 0.5) == (ref_small > 0.5))))

    # --- ragged batch, tiled / weight-resident grid path (v7x 2-TC shardable) ---
    b_big = 520
    x_big = jax.random.normal(kx2, (b_big, in_dim), dtype=jnp.float32)
    out_big = jax.block_until_ready(model_forward(x_big, params, tile_b=256))
    ref_big = _reference(x_big, params)
    assert out_big.shape == (b_big, 1)
    assert jnp.allclose(out_big, ref_big, atol=1e-5, rtol=1e-5)

    # Optional bf16 layer-1 compute (halves x DMA bytes); post-matmul math f32.
    out_bf16 = jax.block_until_ready(
        model_forward(x_big, params, tile_b=256, compute_dtype=jnp.bfloat16))
    assert jnp.allclose(out_bf16, ref_big, atol=5e-2)

    print("KERNEL_OK")
</pallas_src>

<mosaic_0001>
module attributes {stable_mosaic.version = 11 : i64} {
  func.func @kernel(%arg0: memref<8x32xf32, #tpu.memory_space<vmem>>, %arg1: memref<64x32xf32, #tpu.memory_space<vmem>>, %arg2: memref<64x1xf32, #tpu.memory_space<vmem>>, %arg3: memref<64x1xf32, #tpu.memory_space<vmem>>, %arg4: memref<1x1xf32, #tpu.memory_space<smem>>, %arg5: memref<1x8xf32, #tpu.memory_space<vmem>>) attributes {dimension_semantics = [], scalar_prefetch = 0 : i64, scratch_operands = 0 : i64, tpu.core_type = #tpu.core_type<tc>} {
    %c0 = arith.constant 0 : index
    %c0_0 = arith.constant 0 : index
    %0 = vector.load %arg0[%c0, %c0_0] : memref<8x32xf32, #tpu.memory_space<vmem>>, vector<8x32xf32>
    %c0_1 = arith.constant 0 : index
    %c0_2 = arith.constant 0 : index
    %1 = vector.load %arg1[%c0_1, %c0_2] : memref<64x32xf32, #tpu.memory_space<vmem>>, vector<64x32xf32>
    %c0_3 = arith.constant 0 : index
    %c0_4 = arith.constant 0 : index
    %2 = vector.load %arg2[%c0_3, %c0_4] : memref<64x1xf32, #tpu.memory_space<vmem>>, vector<64x1xf32>
    %c0_5 = arith.constant 0 : index
    %c0_6 = arith.constant 0 : index
    %3 = vector.load %arg3[%c0_5, %c0_6] : memref<64x1xf32, #tpu.memory_space<vmem>>, vector<64x1xf32>
    %c0_7 = arith.constant 0 : index
    %c0_8 = arith.constant 0 : index
    %4 = memref.load %arg4[%c0_7, %c0_8] : memref<1x1xf32, #tpu.memory_space<smem>>
    %cst = arith.constant dense<0.000000e+00> : vector<64x8xf32>
    %5 = tpu.matmul %1, %0, %cst {dimension_numbers = #tpu.dot_dimension_numbers<[1], [1], [0], [0], [0, 0, 1, 0], [], []>} : vector<64x32xf32>, vector<8x32xf32>, vector<64x8xf32> -> vector<64x8xf32>
    %6 = vector.broadcast %2 : vector<64x1xf32> to vector<64x8xf32>
    %7 = arith.addf %5, %6 : vector<64x8xf32>
    %cst_9 = arith.constant 0.000000e+00 : f32
    %8 = vector.broadcast %cst_9 : f32 to vector<64x8xf32>
    %9 = arith.maximumf %7, %8 : vector<64x8xf32>
    %10 = vector.broadcast %3 : vector<64x1xf32> to vector<64x8xf32>
    %11 = arith.mulf %9, %10 : vector<64x8xf32>
    %cst_10 = arith.constant dense<0.000000e+00> : vector<8xf32>
    %12 = vector.multi_reduction <add>, %11, %cst_10 [0] : vector<64x8xf32> to vector<8xf32>
    %13 = vector.shape_cast %12 : vector<8xf32> to vector<1x8xf32>
    %14 = vector.broadcast %4 : f32 to vector<1x8xf32>
    %15 = arith.addf %13, %14 : vector<1x8xf32>
    %16 = arith.negf %15 : vector<1x8xf32>
    %17 = math.exp %16 : vector<1x8xf32>
    %cst_11 = arith.constant 1.000000e+00 : f32
    %18 = vector.broadcast %cst_11 : f32 to vector<1x8xf32>
    %19 = arith.addf %18, %17 : vector<1x8xf32>
    %20 = arith.divf %18, %19 : vector<1x8xf32>
    %c0_12 = arith.constant 0 : index
    %c0_13 = arith.constant 0 : index
    %21 = vector.load %arg5[%c0_12, %c0_13] : memref<1x8xf32, #tpu.memory_space<vmem>>, vector<1x8xf32>
    tpu.vector_store %arg5[%c0_12, %c0_13], %20 {strides = array<i32>} : memref<1x8xf32, #tpu.memory_space<vmem>>, vector<1x8xf32>,
    return
  }
}

</mosaic_0001>

<llo_original>
// kernel: tpu_custom_call.1
$region0: #{tpu_custom_call.1}
  #allocation0 [shape = 'u32[]', space=smem, size = 0x4, offset = 0x4, fixed_abs, tag = 'smem constant byte address 0x4 - core index']
  #allocation1 [shape = 'u32[72,128]{1,0:T(1,128)}', space=vmem, size = 0x9000, scoped, tag = 'internal scratch']
  #allocation2 [shape = 'f32[1,1]{1,0:T(1,128)S(6)}', space=smem, size = 0x200, scoped, tag = 'scoped memory for tpu_custom_call.1']
  %s0 = inlined_call_operand.vmem [shape: f32[8,32], index: 0, kind: input, shape index: {}]
  %s1 = inlined_call_operand.vmem [shape: f32[64,32], index: 1, kind: input, shape index: {}]
  %s2 = inlined_call_operand.vmem [shape: f32[64,1], index: 2, kind: input, shape index: {}]
  %s3 = inlined_call_operand.vmem [shape: f32[64,1], index: 3, kind: input, shape index: {}]
  %s4 = inlined_call_operand.<no memory space> [shape: f32[1,1], index: 4, kind: input, shape index: {}]
  %s5 = inlined_call_operand.hbm [shape: f32[1,8], index: 5, kind: output, shape index: {}]
  %s6 = sld [smem:[#allocation0]]
  $region30: #{tpu_custom_call.1} parent=0
    _
  %s8 = ssub.s32 1, %s6
  %s9 = scalar_select 0, %s8, %s6
  %10 = sst [smem:[#allocation2]] %s4
  $region1: #{tpu_custom_call.1} parent=0
    #allocation3 [shape = 'u8[512]{0}', space=vmem, size = 0x400, scoped, tag = 'output window, operand 0, single buffered']
    #allocation4 [shape = 's32[1]{0}', space=sflag, size = 0x4, scoped, tag = 'scoped memory for tpu_custom_call.1']
    %11 = vsyncpa [#allocation4], 0
    // Predicated region
    $region2: #{tpu_custom_call.1} parent=1 // pred_check
      _
    $region3: #{tpu_custom_call.1} parent=1 // pred_check_branch
      %13 = sbr.rel (0) target = $region5
    $region4: #{tpu_custom_call.1} parent=1 // pred_region
      _
    $region5: #{tpu_custom_call.1} parent=1 // pred_fallthru
      _
    // Predicated region
    $region6: #{tpu_custom_call.1} parent=1 // pred_check
      _
    $region7: #{tpu_custom_call.1} parent=1 // pred_check_branch
      %15 = sbr.rel (0) target = $region9
    $region8: #{tpu_custom_call.1} parent=1 // pred_region
      _
    $region9: #{tpu_custom_call.1} parent=1 // pred_fallthru
      _
    // Predicated region
    $region10: #{tpu_custom_call.1} parent=1 // pred_check
      _
    $region11: #{tpu_custom_call.1} parent=1 // pred_check_branch
      %17 = sbr.rel (0) target = $region13
    $region12: #{tpu_custom_call.1} parent=1 // pred_region
      _
    $region13: #{tpu_custom_call.1} parent=1 // pred_fallthru
      _
    // Predicated region
    $region14: #{tpu_custom_call.1} parent=1 // pred_check
      _
    $region15: #{tpu_custom_call.1} parent=1 // pred_check_branch
      %19 = sbr.rel (0) target = $region17
    $region16: #{tpu_custom_call.1} parent=1 // pred_region
      _
    $region17: #{tpu_custom_call.1} parent=1 // pred_fallthru
      _
    // Predicated region
    $region18: #{tpu_custom_call.1} parent=1 // pred_check
      _
    $region19: #{tpu_custom_call.1} parent=1 // pred_check_branch
      %21 = sbr.rel (0) target = $region21
    $region20: #{tpu_custom_call.1} parent=1 // pred_region
      _
    $region21: #{tpu_custom_call.1} parent=1 // pred_fallthru
      _
    %v22 = vld [vmem:[%s0] sm:$0xff]
    %v23 = vld [vmem:[%s1] sm:$0xff]
    %v24 = vld [vmem:[%s1 + $0x8] sm:$0xff]
    %v25 = vld [vmem:[%s1 + $0x10] sm:$0xff]
    %v26 = vld [vmem:[%s1 + $0x18] sm:$0xff]
    %v27 = vld [vmem:[%s1 + $0x20] sm:$0xff]
    %v28 = vld [vmem:[%s1 + $0x28] sm:$0xff]
    %v29 = vld [vmem:[%s1 + $0x30] sm:$0xff]
    %v30 = vld [vmem:[%s1 + $0x38] sm:$0xff]
    %v31 = vld [vmem:[%s2] sm:$0xff]
    %v32 = vld [vmem:[%s2 + $0x8] sm:$0xff]
    %v33 = vld [vmem:[%s2 + $0x10] sm:$0xff]
    %v34 = vld [vmem:[%s2 + $0x18] sm:$0xff]
    %v35 = vld [vmem:[%s2 + $0x20] sm:$0xff]
    %v36 = vld [vmem:[%s2 + $0x28] sm:$0xff]
    %v37 = vld [vmem:[%s2 + $0x30] sm:$0xff]
    %v38 = vld [vmem:[%s2 + $0x38] sm:$0xff]
    %v39 = vld [vmem:[%s3] sm:$0xff]
    %v40 = vld [vmem:[%s3 + $0x8] sm:$0xff]
    %v41 = vld [vmem:[%s3 + $0x10] sm:$0xff]
    %v42 = vld [vmem:[%s3 + $0x18] sm:$0xff]
    %v43 = vld [vmem:[%s3 + $0x20] sm:$0xff]
    %v44 = vld [vmem:[%s3 + $0x28] sm:$0xff]
    %v45 = vld [vmem:[%s3 + $0x30] sm:$0xff]
    %v46 = vld [vmem:[%s3 + $0x38] sm:$0xff]
    %s47 = sld [smem:[#allocation2]]
    %49 = vset.pattern.permute.xlu0 0
    %50 = vperm.xlu0 %49, %v31
    %v51 = vpop.permute.xlu0 %50
    %54 = vset.pattern.permute.xlu0 0
    %55 = vperm.xlu0 %54, %v32
    %v56 = vpop.permute.xlu0 %55
    %59 = vset.pattern.permute.xlu0 0
    %60 = vperm.xlu0 %59, %v33
    %v61 = vpop.permute.xlu0 %60
    %64 = vset.pattern.permute.xlu0 0
    %65 = vperm.xlu0 %64, %v34
    %v66 = vpop.permute.xlu0 %65
    %69 = vset.pattern.permute.xlu0 0
    %70 = vperm.xlu0 %69, %v35
    %v71 = vpop.permute.xlu0 %70
    %74 = vset.pattern.permute.xlu0 0
    %75 = vperm.xlu0 %74, %v36
    %v76 = vpop.permute.xlu0 %75
    %79 = vset.pattern.permute.xlu0 0
    %80 = vperm.xlu0 %79, %v37
    %v81 = vpop.permute.xlu0 %80
    %84 = vset.pattern.permute.xlu0 0
    %85 = vperm.xlu0 %84, %v38
    %v86 = vpop.permute.xlu0 %85
    %vm88 = vcmask 261120
    %v90 = vsel %vm88, %v23, 0
    %v93 = vsel %vm88, %v24, 0
    %v96 = vsel %vm88, %v25, 0
    %v99 = vsel %vm88, %v26, 0
    %v102 = vsel %vm88, %v27, 0
    %v105 = vsel %vm88, %v28, 0
    %v108 = vsel %vm88, %v29, 0
    %v111 = vsel %vm88, %v30, 0
    %v114 = vsel %vm88, %v22, 0
    %116 = vmatpush.xpose.msra.mxu0 0.0
    %117 = vmatpush.xpose.msra.mxu0 0.0
    %118 = vmatpush.xpose.msra.mxu0 0.0
    %119 = vmatpush.xpose.msra.mxu0 0.0
    %120 = vmatpush.xpose.msra.mxu0 0.0
    %121 = vmatpush.xpose.msra.mxu0 0.0
    %122 = vmatpush.xpose.msra.mxu0 0.0
    %123 = vmatpush.xpose.msra.mxu0 0.0
    %124 = vmatpush.xpose.msra.mxu0 0.0
    %125 = vmatpush.xpose.msra.mxu0 0.0
    %126 = vmatpush.xpose.msra.mxu0 0.0
    %127 = vmatpush.xpose.msra.mxu0 0.0
    %128 = vmatpush.xpose.msra.mxu0 0.0
    %129 = vmatpush.xpose.msra.mxu0 0.0
    %130 = vmatpush.xpose.msra.mxu0 0.0
    %131 = vmatpush.xpose.msra.mxu0 %v114
    %132 = vmatmul.f32.gmra.mxu0 %v90
    %v133 = vpop.f32.mrf.mxu0
    %v134 = vadd.f32 %v51, %v133
    %135 = vmatmul.f32.gmra.mxu0 %v93
    %v136 = vpop.f32.mrf.mxu0
    %v137 = vadd.f32 %v56, %v136
    %138 = vmatmul.f32.gmra.mxu0 %v96
    %v139 = vpop.f32.mrf.mxu0
    %v140 = vadd.f32 %v61, %v139
    %141 = vmatmul.f32.gmra.mxu0 %v99
    %v142 = vpop.f32.mrf.mxu0
    %v143 = vadd.f32 %v66, %v142
    %144 = vmatmul.f32.gmra.mxu0 %v102
    %v145 = vpop.f32.mrf.mxu0
    %v146 = vadd.f32 %v71, %v145
    %147 = vmatmul.f32.gmra.mxu0 %v105
    %v148 = vpop.f32.mrf.mxu0
    %v149 = vadd.f32 %v76, %v148
    %150 = vmatmul.f32.gmra.mxu0 %v108
    %v151 = vpop.f32.mrf.mxu0
    %v152 = vadd.f32 %v81, %v151
    %153 = vmatmul.f32.gmra.mxu0 %v111
    %v154 = vpop.f32.mrf.mxu0
    %v155 = vadd.f32 %v86, %v154
    %156 = vdwg.mxu0
    %v157 = vmax.f32 %v134, 0.0
    %v158 = vmax.f32 %v137, 0.0
    %v159 = vmax.f32 %v140, 0.0
    %v160 = vmax.f32 %v143, 0.0
    %v161 = vmax.f32 %v146, 0.0
    %v162 = vmax.f32 %v149, 0.0
    %v163 = vmax.f32 %v152, 0.0
    %v164 = vmax.f32 %v155, 0.0
    %166 = vset.pattern.permute.xlu0 0
    %167 = vperm.xlu0 %166, %v39
    %v168 = vpop.permute.xlu0 %167
    %171 = vset.pattern.permute.xlu0 0
    %172 = vperm.xlu0 %171, %v40
    %v173 = vpop.permute.xlu0 %172
    %176 = vset.pattern.permute.xlu0 0
    %177 = vperm.xlu0 %176, %v41
    %v178 = vpop.permute.xlu0 %177
    %181 = vset.pattern.permute.xlu0 0
    %182 = vperm.xlu0 %181, %v42
    %v183 = vpop.permute.xlu0 %182
    %186 = vset.pattern.permute.xlu0 0
    %187 = vperm.xlu0 %186, %v43
    %v188 = vpop.permute.xlu0 %187
    %191 = vset.pattern.permute.xlu0 0
    %192 = vperm.xlu0 %191, %v44
    %v193 = vpop.permute.xlu0 %192
    %196 = vset.pattern.permute.xlu0 0
    %197 = vperm.xlu0 %196, %v45
    %v198 = vpop.permute.xlu0 %197
    %201 = vset.pattern.permute.xlu0 0
    %202 = vperm.xlu0 %201, %v46
    %v203 = vpop.permute.xlu0 %202
    %v205 = vmul.f32 %v157, %v168
    %v206 = vmul.f32 %v158, %v173
    %v207 = vmul.f32 %v159, %v178
    %v208 = vmul.f32 %v160, %v183
    %v209 = vmul.f32 %v161, %v188
    %v210 = vmul.f32 %v162, %v193
    %v211 = vmul.f32 %v163, %v198
    %v212 = vmul.f32 %v164, %v203
    %vm213 = vcmask 64512
    %v214 = vsel %vm213, %v205, 0.0
    %v215 = vsel %vm213, %v206, 0.0
    %v216 = vadd.f32 %v214, %v215
    %v217 = vsel %vm213, %v207, 0.0
    %v218 = vadd.f32 %v216, %v217
    %v219 = vsel %vm213, %v208, 0.0
    %v220 = vadd.f32 %v218, %v219
    %v221 = vsel %vm213, %v209, 0.0
    %v222 = vadd.f32 %v220, %v221
    %v223 = vsel %vm213, %v210, 0.0
    %v224 = vadd.f32 %v222, %v223
    %v225 = vsel %vm213, %v211, 0.0
    %v226 = vadd.f32 %v224, %v225
    %v227 = vsel %vm213, %v212, 0.0
    %v228 = vadd.f32 %v226, %v227
    %v229 = vrot.slane %v228, 4
    %v230 = vadd.f32 %v228, %v229
    %v231 = vrot.slane %v230, 2
    %v232 = vadd.f32 %v230, %v231
    %v233 = vrot.slane %v232, 1
    %v234 = vadd.f32 %v232, %v233
    %v235 = vstv %s47
    %v236 = vadd.f32 %v234, %v235
    %v237 = vxor.u32 %v236, 2147483648
    %v238 = vmul.f32 %v237, 1.442695
    %v239 = vpow.pop %v238
    %v240 = vadd.f32 %v239, 1.0
    %v241 = vrcp.pop %v240
    %v242 = vmul.f32 %v240, %v241
    %v243 = vsub.f32 1.0, %v242
    %v244 = vmul.f32 %v241, %v243
    %v245 = vadd.f32 %v241, %v244
    %vm246 = vweird.f32 %v240
    %vm247 = vweird.f32 %v241
    %vm248 = vmor %vm246, %vm247
    %v249 = vsel %vm248, %v241, %v245
    %v250 = vand.u32 2147483647, %v240
    %vm251 = vcmp.eq.f32.partialorder %v250, 8.507059e+37
    %v252 = vand.u32 %v240, 2147483648
    %v253 = vor.u32 1.1754944e-38, %v252
    %v254 = vsel %vm251, %v253, %v249
    %v255 = vmul.f32 1.0, %v254
    %vm256 = vcmask 57344
    %257 = vst.msk [vmem:[#allocation3] sm:$0x1] %vm256, %v255
    // Predicated region
    $region22: #{tpu_custom_call.1} parent=1 // pred_check
      _
    $region23: #{tpu_custom_call.1} parent=1 // pred_check_branch
      %259 = sbr.rel (0) target = $region25
    $region24: #{tpu_custom_call.1} parent=1 // pred_region
      %261 = vsyncadd [#allocation4], 0
      %s263 = sshll.u32 [#allocation3], 4
      %s264 = int_to_ptr.vmem [resolvable:$true] %s263
      %s265 = sshll.u32 %s5, 4
      %s266 = int_to_ptr.hbm [resolvable:$true] %s265
      %268 = dma.vmem_to_hbm [thread:$0]  %s264, 16, %s266, [#allocation4]
    $region25: #{tpu_custom_call.1} parent=1 // pred_fallthru
      _
    // Predicated region
    $region26: #{tpu_custom_call.1} parent=1 // pred_check
      _
    $region27: #{tpu_custom_call.1} parent=1 // pred_check_branch
      %270 = sbr.rel (0) target = $region29
    $region28: #{tpu_custom_call.1} parent=1 // pred_region
      %272 = dma.done [#allocation4], 16
    $region29: #{tpu_custom_call.1} parent=1 // pred_fallthru
      _
    %273 = vsyncpa [#allocation4], 1

</llo_original>
